<compile_context>
chip_gen: v5e
topology: v5e:2x2
jax: 0.10.0
libtpu: 0.0.40
codegen_flags: <defaults>
</compile_context>

<pallas_src>
import math

import jax
import jax.numpy as jnp
from jax.experimental import pallas as pl
from jax.experimental.pallas import tpu as pltpu


def _drop_path_kernel(x_ref, scale_ref, o_ref):
    """o = x * scale, scale broadcast per sample (row) across all lanes.

    x_ref / o_ref : (TB, TL) tile of the flattened (B, C*H*W) activations.
    scale_ref     : (TB, 1) per-sample factor: 0.0 (dropped) or 1/keep_prob.
    """
    o_ref[...] = x_ref[...] * scale_ref[...]


def _choose_tiles(B, L, itemsize):
    """Pick (TB, TL) obeying the (8, 128) rule, targeting ~2 MiB per block."""
    LANE, SUB = 128, 8
    TB = B if B <= SUB else SUB                     # full dim or multiple of 8
    if L % LANE != 0:
        TL = L                                      # full last dim is always legal
    else:
        target_lanes = (2 * 1024 * 1024) // max(1, TB * itemsize)
        TL = min(L, max(LANE, (target_lanes // LANE) * LANE))
    return TB, TL


def drop_path_pallas(x, *, drop_prob: float = 0.0, training: bool = False,
                     scale_by_keep: bool = True, key=None):
    """Pallas equivalent of timm's drop_path (per-sample stochastic depth)."""
    if drop_prob == 0.0 or not training:
        return x

    keep_prob = 1.0 - drop_prob
    B = x.shape[0]
    L = int(math.prod(x.shape[1:]))
    x2 = x.reshape(B, L)

    # Per-sample keep/scale vector computed once in the wrapper (cheap, (B,)).
    if key is None:
        key = jax.random.PRNGKey(0)
    keep = jax.random.bernoulli(key, p=keep_prob, shape=(B,))
    scale_val = (1.0 / keep_prob) if (scale_by_keep and keep_prob > 0.0) else 1.0
    scale = jnp.where(keep, scale_val, 0.0).astype(x.dtype).reshape(B, 1)

    TB, TL = _choose_tiles(B, L, jnp.dtype(x.dtype).itemsize)
    grid = (pl.cdiv(B, TB), pl.cdiv(L, TL))

    out = pl.pallas_call(
        _drop_path_kernel,
        out_shape=jax.ShapeDtypeStruct((B, L), x.dtype),
        grid=grid,
        in_specs=[
            pl.BlockSpec((TB, TL), lambda i, j: (i, j)),   # activations
            pl.BlockSpec((TB, 1), lambda i, j: (i, 0)),    # per-sample scales
        ],
        out_specs=pl.BlockSpec((TB, TL), lambda i, j: (i, j)),
        compiler_params=pltpu.CompilerParams(
            dimension_semantics=("parallel", "parallel"),
        ),
    )(x2, scale)

    return out.reshape(x.shape)


class DropPath:
    """Mirror of the PyTorch DropPath module (forward only)."""

    def __init__(self, drop_prob: float = 0.0, scale_by_keep: bool = True):
        self.drop_prob = drop_prob
        self.scale_by_keep = scale_by_keep
        self.training = True  # PyTorch default for a freshly-constructed module

    def __call__(self, x, key=None):
        return drop_path_pallas(
            x,
            drop_prob=self.drop_prob,
            training=self.training,
            scale_by_keep=self.scale_by_keep,
            key=key,
        )


if __name__ == "__main__":
    key = jax.random.PRNGKey(0)
    B, C, H, W = 2, 4, 16, 16
    x = jax.random.normal(key, (B, C, H, W), dtype=jnp.float32)

    # Training path (drop_prob > 0): per-sample mask, scaled by 1/keep_prob.
    mod = DropPath(drop_prob=0.25, scale_by_keep=True)
    y = jax.block_until_ready(mod(x, key=jax.random.PRNGKey(123)))

    # Sanity: each sample must be either all-zeros or x / keep_prob.
    keep_prob = 1.0 - mod.drop_prob
    for b in range(B):
        yb = y[b]
        is_zero = bool(jnp.all(yb == 0.0))
        is_scaled = bool(jnp.allclose(yb, x[b] / keep_prob, rtol=1e-5, atol=1e-6))
        assert is_zero or is_scaled, f"sample {b}: not a valid drop-path output"

    # Eval path: identity.
    mod.training = False
    y_eval = jax.block_until_ready(mod(x))
    assert bool(jnp.array_equal(y_eval, x)), "eval mode must be identity"

    print("KERNEL_OK")
</pallas_src>

<mosaic_0001>
module attributes {stable_mosaic.version = 11 : i64} {
  func.func @_drop_path_kernel(%arg0: i32, %arg1: i32, %arg2: memref<2x1024xf32, #tpu.memory_space<vmem>>, %arg3: memref<2x1xf32, #tpu.memory_space<vmem>>, %arg4: memref<2x1024xf32, #tpu.memory_space<vmem>>) attributes {dimension_semantics = [#tpu.dimension_semantics<parallel>, #tpu.dimension_semantics<parallel>], iteration_bounds = array<i64: 1, 1>, scalar_prefetch = 0 : i64, scratch_operands = 0 : i64, tpu.core_type = #tpu.core_type<tc>, window_params = [{transform_indices = @transform_0, window_bounds = array<i64: 2, 1024>}, {transform_indices = @transform_1, window_bounds = array<i64: 2, 1>}, {transform_indices = @transform_2, window_bounds = array<i64: 2, 1024>}]} {
    %c0 = arith.constant 0 : index
    %c0_0 = arith.constant 0 : index
    %0 = vector.load %arg2[%c0, %c0_0] : memref<2x1024xf32, #tpu.memory_space<vmem>>, vector<2x1024xf32>
    %c0_1 = arith.constant 0 : index
    %c0_2 = arith.constant 0 : index
    %1 = vector.load %arg3[%c0_1, %c0_2] : memref<2x1xf32, #tpu.memory_space<vmem>>, vector<2x1xf32>
    %2 = vector.broadcast %1 : vector<2x1xf32> to vector<2x1024xf32>
    %3 = arith.mulf %0, %2 : vector<2x1024xf32>
    %c0_3 = arith.constant 0 : index
    %c0_4 = arith.constant 0 : index
    %4 = vector.load %arg4[%c0_3, %c0_4] : memref<2x1024xf32, #tpu.memory_space<vmem>>, vector<2x1024xf32>
    tpu.vector_store %arg4[%c0_3, %c0_4], %3 {strides = array<i32>} : memref<2x1024xf32, #tpu.memory_space<vmem>>, vector<2x1024xf32>,
    return
  }
  func.func @transform_0(%arg0: i32, %arg1: i32) -> (i32, i32) {
    %c0_i32 = arith.constant 0 : i32
    return %arg0, %arg1 : i32, i32
  }
  func.func @transform_1(%arg0: i32, %arg1: i32) -> (i32, i32) {
    %c0_i32 = arith.constant 0 : i32
    %c0_i32_0 = arith.constant 0 : i32
    return %arg0, %c0_i32 : i32, i32
  }
  func.func @transform_2(%arg0: i32, %arg1: i32) -> (i32, i32) {
    %c0_i32 = arith.constant 0 : i32
    return %arg0, %arg1 : i32, i32
  }
}

</mosaic_0001>

<llo_original>
// kernel: tpu_custom_call.1
$region0: #{tpu_custom_call.1}
  #allocation0 [shape = 'u32[]', space=smem, size = 0x4, offset = 0x4, fixed_abs, tag = 'smem constant byte address 0x4 - core index']
  #allocation1 [shape = 'u32[72,128]{1,0:T(1,128)}', space=vmem, size = 0x9000, scoped, tag = 'internal scratch']
  %s0 = inlined_call_operand.hbm [shape: f32[2,1024], index: 0, kind: input, shape index: {}]
  %s1 = inlined_call_operand.vmem [shape: f32[2,1], index: 1, kind: input, shape index: {}]
  %s2 = inlined_call_operand.hbm [shape: f32[2,1024], index: 2, kind: output, shape index: {}]
  %s3 = sld [smem:[#allocation0]]
  $region22: #{tpu_custom_call.1} parent=0
    _
  %s5 = ssub.s32 1, %s3
  %s6 = scalar_select 0, %s5, %s3
  $region1: #{tpu_custom_call.1} parent=0
    #allocation2 [shape = 'u8[8192]{0}', space=vmem, size = 0x2000, scoped, tag = 'input window, operand 0, single buffered']
    #allocation3 [shape = 's32[1]{0}', space=sflag, size = 0x4, scoped, tag = 'scoped memory for tpu_custom_call.1']
    #allocation4 [shape = 's32[1]{0}', space=sflag, size = 0x4, scoped, tag = 'scoped memory for tpu_custom_call.1']
    #allocation5 [shape = 'u8[8192]{0}', space=vmem, size = 0x2000, scoped, tag = 'output window, operand 0, single buffered']
    %7 = vsyncpa [#allocation3], 0
    %8 = vsyncpa [#allocation4], 0
    // Predicated region
    $region2: #{tpu_custom_call.1} parent=1 // pred_check
      _
    $region3: #{tpu_custom_call.1} parent=1 // pred_check_branch
      %10 = sbr.rel (0) target = $region5
    $region4: #{tpu_custom_call.1} parent=1 // pred_region
      %12 = vsyncadd [#allocation3], 0
      %s14 = sshll.u32 %s0, 4
      %s15 = int_to_ptr.hbm [resolvable:$true] %s14
      %s16 = sshll.u32 [#allocation2], 4
      %s17 = int_to_ptr.vmem [resolvable:$true] %s16
      %19 = dma.hbm_to_vmem [thread:$0]  %s15, 256, %s17, [#allocation3]
    $region5: #{tpu_custom_call.1} parent=1 // pred_fallthru
      _
    // Predicated region
    $region6: #{tpu_custom_call.1} parent=1 // pred_check
      _
    $region7: #{tpu_custom_call.1} parent=1 // pred_check_branch
      %21 = sbr.rel (0) target = $region9
    $region8: #{tpu_custom_call.1} parent=1 // pred_region
      _
    $region9: #{tpu_custom_call.1} parent=1 // pred_fallthru
      _
    // Predicated region
    $region10: #{tpu_custom_call.1} parent=1 // pred_check
      _
    $region11: #{tpu_custom_call.1} parent=1 // pred_check_branch
      %23 = sbr.rel (0) target = $region13
    $region12: #{tpu_custom_call.1} parent=1 // pred_region
      %25 = dma.done [#allocation3], 256
    $region13: #{tpu_custom_call.1} parent=1 // pred_fallthru
      _
    %v26 = vld [vmem:[#allocation2] sm:$0xff]
    %v27 = vld [vmem:[#allocation2 + $0x8] sm:$0xff]
    %v28 = vld [vmem:[%s1] sm:$0x3]
    %30 = vset.pattern.permute.xlu0 0
    %31 = vperm.xlu0 %30, %v28
    %v32 = vpop.permute.xlu0 %31
    %v34 = vunpack.c.l.s4 269488144
    %v35 = vunpack.c.0.s8 %v34
    %v36 = vperm.slane %v32, %v35
    %v38 = vmul.f32 %v26, %v36
    %v39 = vmul.f32 %v27, %v36
    %40 = vst [vmem:[#allocation5] sm:$0xff] %v38
    %41 = vst [vmem:[#allocation5 + $0x8] sm:$0xff] %v39
    // Predicated region
    $region14: #{tpu_custom_call.1} parent=1 // pred_check
      _
    $region15: #{tpu_custom_call.1} parent=1 // pred_check_branch
      %43 = sbr.rel (0) target = $region17
    $region16: #{tpu_custom_call.1} parent=1 // pred_region
      %45 = vsyncadd [#allocation4], 0
      %s47 = sshll.u32 [#allocation5], 4
      %s48 = int_to_ptr.vmem [resolvable:$true] %s47
      %s49 = sshll.u32 %s2, 4
      %s50 = int_to_ptr.hbm [resolvable:$true] %s49
      %52 = dma.vmem_to_hbm [thread:$0]  %s48, 256, %s50, [#allocation4]
    $region17: #{tpu_custom_call.1} parent=1 // pred_fallthru
      _
    // Predicated region
    $region18: #{tpu_custom_call.1} parent=1 // pred_check
      _
    $region19: #{tpu_custom_call.1} parent=1 // pred_check_branch
      %54 = sbr.rel (0) target = $region21
    $region20: #{tpu_custom_call.1} parent=1 // pred_region
      %56 = dma.done [#allocation4], 256
    $region21: #{tpu_custom_call.1} parent=1 // pred_fallthru
      _
    %57 = vsyncpa [#allocation3], 1
    %58 = vsyncpa [#allocation4], 1

</llo_original>
